<compile_context>
chip_gen: v5e
topology: v5e:2x2
jax: 0.10.0
libtpu: 0.0.40
codegen_flags: <defaults>
</compile_context>

<pallas_src>
import math
from functools import partial

import jax
import jax.numpy as jnp
from jax import lax
from jax.experimental import pallas as pl
from jax.experimental.pallas import tpu as pltpu


_MASK = -1e30     # applied to scores in f32, before any exp / downcast


# --------------------------------------------------------------------------
# helpers
# --------------------------------------------------------------------------
def _layernorm(h, g, b, eps=1e-5):
    mu = jnp.mean(h, axis=-1, keepdims=True)
    var = jnp.mean((h - mu) ** 2, axis=-1, keepdims=True)
    return (h - mu) * lax.rsqrt(var + eps) * g + b


def _gelu_tanh(x):
    # PyTorch nn.GELU(approximate='tanh')
    return 0.5 * x * (1.0 + jnp.tanh(
        math.sqrt(2.0 / math.pi) * (x + 0.044715 * x * x * x)))


def _pick_tile(total, preferred):
    t = max(1, min(preferred, total))
    while total % t:
        t //= 2
    return max(t, 1)


def _vmem_limit_bytes():
    # Review item: generation-aware scoped-VMEM budget instead of a hard 48 MiB.
    try:
        return int(0.75 * pltpu.get_tpu_info().vmem_capacity_bytes)
    except Exception:
        return 64 * 1024 * 1024


def _default_seq_tile():
    # 256-wide tiles fill the 2x256x256 MXUs on v6e/v7x; keep 128 on <= v5.
    try:
        kind = jax.devices()[0].device_kind.lower()
    except Exception:
        return 256
    if any(v in kind for v in ("v2", "v3", "v4", "v5")):
        return 128
    return 256


_SINGLE_BUF_OK = None


def _single_buffering_supported():
    """Probe pipeline_mode=pl.Buffered(1) once (used for constant weight specs)."""
    global _SINGLE_BUF_OK
    if _SINGLE_BUF_OK is not None:
        return _SINGLE_BUF_OK
    ok = False
    if hasattr(pl, "Buffered"):
        try:
            def _copy(x_ref, o_ref):
                o_ref[...] = x_ref[...]
            out = pl.pallas_call(
                _copy,
                out_shape=jax.ShapeDtypeStruct((8, 128), jnp.float32),
                grid=(2,),
                in_specs=[pl.BlockSpec((8, 128), lambda i: (0, 0),
                                       pipeline_mode=pl.Buffered(1))],
                out_specs=pl.BlockSpec((8, 128), lambda i: (0, 0)),
            )(jnp.ones((8, 128), jnp.float32))
            ok = bool(jnp.all(jax.block_until_ready(out) == 1.0))
        except Exception:
            ok = False
    _SINGLE_BUF_OK = ok
    return ok


def _const_spec(shape, single_buffer):
    index_map = lambda *_: (0,) * len(shape)
    if single_buffer:
        # Constant block index -> default double buffering is pure VMEM waste.
        return pl.BlockSpec(shape, index_map, pipeline_mode=pl.Buffered(1))
    return pl.BlockSpec(shape, index_map)


# --------------------------------------------------------------------------
# kernel 1: LN1 + Q/K/V projections
# --------------------------------------------------------------------------
def _qkv_kernel(x_ref, g_ref, b_ref, wq_ref, wk_ref, wv_ref,
                bq_ref, bk_ref, bv_ref, q_out, k_out, v_out):
    h = _layernorm(x_ref[0], g_ref[0], b_ref[0]).astype(jnp.bfloat16)
    q_out[0] = (jnp.dot(h, wq_ref[...], preferred_element_type=jnp.float32)
                + bq_ref[0]).astype(q_out.dtype)
    k_out[0] = (jnp.dot(h, wk_ref[...], preferred_element_type=jnp.float32)
                + bk_ref[0]).astype(k_out.dtype)
    v_out[0] = (jnp.dot(h, wv_ref[...], preferred_element_type=jnp.float32)
                + bv_ref[0]).astype(v_out.dtype)


# --------------------------------------------------------------------------
# kernel 2: causal flash attention, K/V streamed from HBM (manual DMA)
# --------------------------------------------------------------------------
def _attn_kernel(q_ref, k_hbm, v_hbm, o_ref,
                 kbuf, vbuf, sem, m_sc, l_sc, acc_sc):
    b = pl.program_id(0)
    qi = pl.program_id(1)
    _, nh, tq, hd = q_ref.shape
    tk = tq

    def _copies(j, slot):
        col0 = pl.multiple_of(j * tk, tk)
        ck = pltpu.make_async_copy(k_hbm.at[b, :, pl.ds(col0, tk), :],
                                   kbuf.at[slot], sem.at[0, slot])
        cv = pltpu.make_async_copy(v_hbm.at[b, :, pl.ds(col0, tk), :],
                                   vbuf.at[slot], sem.at[1, slot])
        return ck, cv

    def _start(j, slot):
        ck, cv = _copies(j, slot)
        ck.start()
        cv.start()

    def _wait(j, slot):
        ck, cv = _copies(j, slot)
        ck.wait()
        cv.wait()

    # Prime the pipeline with KV tile 0 and reset the online-softmax state.
    _start(0, 0)
    m_sc[...] = jnp.full(m_sc.shape, _MASK, jnp.float32)
    l_sc[...] = jnp.zeros(l_sc.shape, jnp.float32)
    acc_sc[...] = jnp.zeros(acc_sc.shape, jnp.float32)

    q = q_ref[0]                                   # (nh, TQ, hd) bf16, pre-scaled

    def _online_update(s, vj):
        m_new = jnp.maximum(m_sc[...], jnp.max(s, axis=-1, keepdims=True))
        alpha = jnp.exp(m_sc[...] - m_new)
        p = jnp.exp(s - m_new)                     # f32 (mask-safe)
        l_sc[...] = alpha * l_sc[...] + jnp.sum(p, axis=-1, keepdims=True)
        acc_sc[...] = alpha * acc_sc[...] + jnp.einsum(
            'hqk,hkd->hqd', p.astype(jnp.bfloat16), vj,
            preferred_element_type=jnp.float32)
        m_sc[...] = m_new

    # Off-diagonal KV tiles 0 .. qi-1: fully unmasked (no iota / select work).
    def _body(j, carry):
        slot = j & 1
        _wait(j, slot)
        _start(j + 1, 1 - slot)                    # j + 1 <= qi: always a valid tile
        s = jnp.einsum('hqd,hkd->hqk', q, kbuf[slot],
                       preferred_element_type=jnp.float32)
        _online_update(s, vbuf[slot])
        return carry

    lax.fori_loop(0, qi, _body, 0)

    # Diagonal tile j == qi: causal mask via one 2-D iota broadcast over heads.
    slot = qi & 1
    _wait(qi, slot)
    s = jnp.einsum('hqd,hkd->hqk', q, kbuf[slot],
                   preferred_element_type=jnp.float32)
    row = lax.broadcasted_iota(jnp.int32, (tq, tk), 0)
    col = lax.broadcasted_iota(jnp.int32, (tq, tk), 1)
    s = jnp.where((col > row)[None, :, :], _MASK, s)
    _online_update(s, vbuf[slot])

    o_ref[0] = (acc_sc[...] * pl.reciprocal(l_sc[...], approx=True)
                ).astype(o_ref.dtype)


# --------------------------------------------------------------------------
# kernel 3: out-proj + residual + LN2 + MLP + residual (hidden dim streamed)
# --------------------------------------------------------------------------
def _proj_mlp_kernel(x_ref, y_ref, wo_ref, bo_ref, g2_ref, b2_ref,
                     wfc_ref, bfc_ref, wp_ref, bp_ref, o_ref,
                     x1_sc, h2_sc, acc_sc):
    f = pl.program_id(2)

    @pl.when(f == 0)
    def _():
        attn = jnp.dot(y_ref[0], wo_ref[...],
                       preferred_element_type=jnp.float32) + bo_ref[0]
        x1 = x_ref[0] + attn
        x1_sc[...] = x1
        h2_sc[...] = _layernorm(x1, g2_ref[0], b2_ref[0]).astype(jnp.bfloat16)
        acc_sc[...] = jnp.zeros(acc_sc.shape, jnp.float32)

    h = jnp.dot(h2_sc[...], wfc_ref[...],
                preferred_element_type=jnp.float32) + bfc_ref[0]
    h = _gelu_tanh(h)
    acc_sc[...] = acc_sc[...] + jnp.dot(h.astype(jnp.bfloat16), wp_ref[...],
                                        preferred_element_type=jnp.float32)

    @pl.when(f == pl.num_programs(2) - 1)
    def _():
        o_ref[0] = x1_sc[...] + acc_sc[...] + bp_ref[0]


# --------------------------------------------------------------------------
# wrapper
# --------------------------------------------------------------------------
def prepare_block_params(params, n_head):
    """One-time weight prep (review item): split the fused QKV weight, fold
    1/sqrt(hd) into the Q projection, pre-cast every MXU operand to bf16."""
    C = params["wqkv"].shape[0]
    hd = C // n_head
    scale = 1.0 / math.sqrt(hd)
    f32, bf16 = jnp.float32, jnp.bfloat16
    wqkv = params["wqkv"].astype(f32)
    bqkv = params["bqkv"].astype(f32)
    return {
        "ln1_g": params["ln1_g"].astype(f32),
        "ln1_b": params["ln1_b"].astype(f32),
        "wq": (wqkv[:, :C] * scale).astype(bf16),
        "wk": wqkv[:, C:2 * C].astype(bf16),
        "wv": wqkv[:, 2 * C:].astype(bf16),
        "bq": bqkv[:, :C] * scale,
        "bk": bqkv[:, C:2 * C],
        "bv": bqkv[:, 2 * C:],
        "wo": params["wo"].astype(bf16),
        "bo": params["bo"].astype(f32),
        "ln2_g": params["ln2_g"].astype(f32),
        "ln2_b": params["ln2_b"].astype(f32),
        "wfc": params["wfc"].astype(bf16),
        "bfc": params["bfc"].astype(f32),
        "wp": params["wp"].astype(bf16),
        "bp": params["bp"].astype(f32),
    }


def block_forward(x, prep, n_head, *, seq_tile=None, ff_tile=None):
    """x: (B, T, C) float32.  prep: output of prepare_block_params()."""
    B, T, C = x.shape
    assert C % n_head == 0
    hd = C // n_head
    f32, bf16 = jnp.float32, jnp.bfloat16

    if seq_tile is None:
        seq_tile = _pick_tile(T, _default_seq_tile())
    assert T % seq_tile == 0
    nq = T // seq_tile
    if ff_tile is None:
        ff_tile = _pick_tile(4 * C, 512)
    assert (4 * C) % ff_tile == 0
    nf = (4 * C) // ff_tile

    single_buf = _single_buffering_supported()
    const = partial(_const_spec, single_buffer=single_buf)
    vmem_limit = _vmem_limit_bytes()
    cparams2 = pltpu.CompilerParams(
        dimension_semantics=("parallel", "parallel"),
        vmem_limit_bytes=vmem_limit)
    cparams3 = pltpu.CompilerParams(
        dimension_semantics=("parallel", "parallel", "arbitrary"),
        vmem_limit_bytes=vmem_limit)

    def seq2(shape):            # (1, seq_tile, last) tile over (B, T, last); 2-D grid
        return pl.BlockSpec(shape, lambda b, q: (b, q, 0))

    def seq3(shape):            # same tiling, 3-D grid (hidden-dim axis f ignored)
        return pl.BlockSpec(shape, lambda b, q, f: (b, q, 0))

    # ---- 1) LN1 + Q/K/V projections (three outputs: no split copy) ----
    q, k, v = pl.pallas_call(
        _qkv_kernel,
        out_shape=(jax.ShapeDtypeStruct((B, T, C), bf16),) * 3,
        grid=(B, nq),
        in_specs=[seq2((1, seq_tile, C)),
                  const((1, C)), const((1, C)),
                  const((C, C)), const((C, C)), const((C, C)),
                  const((1, C)), const((1, C)), const((1, C))],
        out_specs=(seq2((1, seq_tile, C)),) * 3,
        compiler_params=cparams2,
    )(x, prep["ln1_g"], prep["ln1_b"],
      prep["wq"], prep["wk"], prep["wv"],
      prep["bq"], prep["bk"], prep["bv"])

    # Head split (wrapper-side layout plumbing; see TODO at top of file).
    def heads(t):                                   # (B,T,C) -> (B,nh,T,hd)
        return t.reshape(B, T, n_head, hd).transpose(0, 2, 1, 3)

    qh, kh, vh = heads(q), heads(k), heads(v)

    # ---- 2) causal flash attention; K/V streamed from HBM ----
    yh = pl.pallas_call(
        _attn_kernel,
        out_shape=jax.ShapeDtypeStruct((B, n_head, T, hd), bf16),
        grid=(B, nq),
        in_specs=[pl.BlockSpec((1, n_head, seq_tile, hd),
                               lambda b, q: (b, 0, q, 0)),
                  pl.BlockSpec(memory_space=pl.ANY),        # K stays in HBM
                  pl.BlockSpec(memory_space=pl.ANY)],       # V stays in HBM
        out_specs=pl.BlockSpec((1, n_head, seq_tile, hd),
                               lambda b, q: (b, 0, q, 0)),
        scratch_shapes=[
            pltpu.VMEM((2, n_head, seq_tile, hd), bf16),    # K double buffer
            pltpu.VMEM((2, n_head, seq_tile, hd), bf16),    # V double buffer
            pltpu.SemaphoreType.DMA((2, 2)),
            pltpu.VMEM((n_head, seq_tile, 1), f32),         # running max
            pltpu.VMEM((n_head, seq_tile, 1), f32),         # running sum
            pltpu.VMEM((n_head, seq_tile, hd), f32),        # output accumulator
        ],
        compiler_params=cparams2,
    )(qh, kh, vh)

    # Merge heads back to (B, T, C).
    y = yh.transpose(0, 2, 1, 3).reshape(B, T, C)

    # ---- 3) out-proj + residual + LN2 + MLP + residual ----
    out = pl.pallas_call(
        _proj_mlp_kernel,
        out_shape=jax.ShapeDtypeStruct((B, T, C), f32),
        grid=(B, nq, nf),
        in_specs=[seq3((1, seq_tile, C)),                   # residual stream x
                  seq3((1, seq_tile, C)),                   # merged attention heads
                  const((C, C)), const((1, C)),             # attn c_proj
                  const((1, C)), const((1, C)),             # ln_2
                  pl.BlockSpec((C, ff_tile), lambda b, q, f: (0, f)),   # c_fc W
                  pl.BlockSpec((1, ff_tile), lambda b, q, f: (0, f)),   # c_fc b
                  pl.BlockSpec((ff_tile, C), lambda b, q, f: (f, 0)),   # mlp c_proj W
                  const((1, C))],                           # mlp c_proj b
        out_specs=seq3((1, seq_tile, C)),
        scratch_shapes=[pltpu.VMEM((seq_tile, C), f32),     # x + attn residual
                        pltpu.VMEM((seq_tile, C), bf16),    # LN2 output
                        pltpu.VMEM((seq_tile, C), f32)],    # MLP accumulator
        compiler_params=cparams3,
    )(x, y, prep["wo"], prep["bo"], prep["ln2_g"], prep["ln2_b"],
      prep["wfc"], prep["bfc"], prep["wp"], prep["bp"])

    return out


# --------------------------------------------------------------------------
# pure-JAX f32 reference (mirrors the PyTorch Block forward)
# --------------------------------------------------------------------------
def block_reference(x, params, n_head):
    B, T, C = x.shape
    hd = C // n_head

    def ln(h, g, b):
        mu = jnp.mean(h, axis=-1, keepdims=True)
        var = jnp.mean((h - mu) ** 2, axis=-1, keepdims=True)
        return (h - mu) * lax.rsqrt(var + 1e-5) * g[0] + b[0]

    h = ln(x, params["ln1_g"], params["ln1_b"])
    qkv = h @ params["wqkv"] + params["bqkv"][0]
    q, k, v = jnp.split(qkv, 3, axis=-1)
    q = q.reshape(B, T, n_head, hd).transpose(0, 2, 1, 3)
    k = k.reshape(B, T, n_head, hd).transpose(0, 2, 1, 3)
    v = v.reshape(B, T, n_head, hd).transpose(0, 2, 1, 3)
    s = jnp.einsum("bhqd,bhkd->bhqk", q, k) / math.sqrt(hd)
    mask = jnp.tril(jnp.ones((T, T), dtype=bool))
    s = jnp.where(mask, s, -1e30)
    p = jax.nn.softmax(s, axis=-1)
    y = jnp.einsum("bhqk,bhkd->bhqd", p, v).transpose(0, 2, 1, 3).reshape(B, T, C)
    x = x + y @ params["wo"] + params["bo"][0]

    h2 = ln(x, params["ln2_g"], params["ln2_b"])
    f = _gelu_tanh(h2 @ params["wfc"] + params["bfc"][0])
    x = x + f @ params["wp"] + params["bp"][0]
    return x


if __name__ == "__main__":
    # Small config consistent with the module: batch=2, seq=8, n_embd=32, n_head=4
    B, T, C, n_head = 2, 8, 32, 4

    key = jax.random.PRNGKey(0)
    keys = jax.random.split(key, 8)

    params = {
        "ln1_g": jnp.ones((1, C), jnp.float32),
        "ln1_b": jnp.zeros((1, C), jnp.float32),
        "wqkv": 0.02 * jax.random.normal(keys[0], (C, 3 * C), jnp.float32),
        "bqkv": 0.02 * jax.random.normal(keys[1], (1, 3 * C), jnp.float32),
        "wo":   0.02 * jax.random.normal(keys[2], (C, C), jnp.float32),
        "bo":   0.02 * jax.random.normal(keys[3], (1, C), jnp.float32),
        "ln2_g": jnp.ones((1, C), jnp.float32),
        "ln2_b": jnp.zeros((1, C), jnp.float32),
        "wfc":  0.02 * jax.random.normal(keys[4], (C, 4 * C), jnp.float32),
        "bfc":  0.02 * jax.random.normal(keys[5], (1, 4 * C), jnp.float32),
        "wp":   0.02 * jax.random.normal(keys[6], (4 * C, C), jnp.float32),
        "bp":   0.02 * jax.random.normal(keys[7], (1, C), jnp.float32),
    }

    x = jax.random.normal(jax.random.PRNGKey(42), (B, T, C), jnp.float32)

    prep = prepare_block_params(params, n_head)
    out = jax.block_until_ready(block_forward(x, prep, n_head))

    ref = block_reference(x, params, n_head)
    assert out.shape == (B, T, C)
    # bf16 MXU operands (f32 accumulation) + approx reciprocal -> compare to the
    # f32 reference with a tolerance that covers bf16 rounding.
    assert jnp.allclose(out, ref, rtol=2e-2, atol=2e-2), (
        float(jnp.max(jnp.abs(out - ref))))

    print("KERNEL_OK")
</pallas_src>

<mosaic_0001>
module attributes {stable_mosaic.version = 11 : i64} {
  func.func @_copy(%arg0: i32, %arg1: memref<8x128xf32, #tpu.memory_space<vmem>>, %arg2: memref<8x128xf32, #tpu.memory_space<vmem>>) attributes {dimension_semantics = [#tpu.dimension_semantics<arbitrary>], iteration_bounds = array<i64: 2>, scalar_prefetch = 0 : i64, scratch_operands = 0 : i64, tpu.core_type = #tpu.core_type<tc>, window_params = [{pipeline_mode = #tpu.pipeline_mode<synchronous>, transform_indices = @transform_0, window_bounds = array<i64: 8, 128>}, {pipeline_mode = #tpu.pipeline_mode<synchronous>, transform_indices = @transform_1, window_bounds = array<i64: 8, 128>}]} {
    %c0 = arith.constant 0 : index
    %c0_0 = arith.constant 0 : index
    %0 = vector.load %arg1[%c0, %c0_0] : memref<8x128xf32, #tpu.memory_space<vmem>>, vector<8x128xf32>
    %c0_1 = arith.constant 0 : index
    %c0_2 = arith.constant 0 : index
    %1 = vector.load %arg2[%c0_1, %c0_2] : memref<8x128xf32, #tpu.memory_space<vmem>>, vector<8x128xf32>
    tpu.vector_store %arg2[%c0_1, %c0_2], %0 {strides = array<i32>} : memref<8x128xf32, #tpu.memory_space<vmem>>, vector<8x128xf32>,
    return
  }
  func.func @transform_0(%arg0: i32) -> (i32, i32) {
    %c0_i32 = arith.constant 0 : i32
    %c0_i32_0 = arith.constant 0 : i32
    %c0_i32_1 = arith.constant 0 : i32
    return %c0_i32, %c0_i32_0 : i32, i32
  }
  func.func @transform_1(%arg0: i32) -> (i32, i32) {
    %c0_i32 = arith.constant 0 : i32
    %c0_i32_0 = arith.constant 0 : i32
    %c0_i32_1 = arith.constant 0 : i32
    return %c0_i32, %c0_i32_0 : i32, i32
  }
}

module attributes {stable_mosaic.version = 11 : i64} {
  func.func @_qkv_kernel(%arg0: i32, %arg1: i32, %arg2: memref<1x8x32xf32, #tpu.memory_space<vmem>>, %arg3: memref<1x32xf32, #tpu.memory_space<vmem>>, %arg4: memref<1x32xf32, #tpu.memory_space<vmem>>, %arg5: memref<32x32xbf16, #tpu.memory_space<vmem>>, %arg6: memref<32x32xbf16, #tpu.memory_space<vmem>>, %arg7: memref<32x32xbf16, #tpu.memory_space<vmem>>, %arg8: memref<1x32xf32, #tpu.memory_space<vmem>>, %arg9: memref<1x32xf32, #tpu.memory_space<vmem>>, %arg10: memref<1x32xf32, #tpu.memory_space<vmem>>, %arg11: memref<1x8x32xbf16, #tpu.memory_space<vmem>>, %arg12: memref<1x8x32xbf16, #tpu.memory_space<vmem>>, %arg13: memref<1x8x32xbf16, #tpu.memory_space<vmem>>) attributes {dimension_semantics = [#tpu.dimension_semantics<parallel>, #tpu.dimension_semantics<parallel>], iteration_bounds = array<i64: 2, 1>, scalar_prefetch = 0 : i64, scratch_operands = 0 : i64, tpu.core_type = #tpu.core_type<tc>, window_params = [{transform_indices = @transform_0, window_bounds = array<i64: 1, 8, 32>}, {pipeline_mode = #tpu.pipeline_mode<synchronous>, transform_indices = @transform_1, window_bounds = array<i64: 1, 32>}, {pipeline_mode = #tpu.pipeline_mode<synchronous>, transform_indices = @transform_2, window_bounds = array<i64: 1, 32>}, {pipeline_mode = #tpu.pipeline_mode<synchronous>, transform_indices = @transform_3, window_bounds = array<i64: 32, 32>}, {pipeline_mode = #tpu.pipeline_mode<synchronous>, transform_indices = @transform_4, window_bounds = array<i64: 32, 32>}, {pipeline_mode = #tpu.pipeline_mode<synchronous>, transform_indices = @transform_5, window_bounds = array<i64: 32, 32>}, {pipeline_mode = #tpu.pipeline_mode<synchronous>, transform_indices = @transform_6, window_bounds = array<i64: 1, 32>}, {pipeline_mode = #tpu.pipeline_mode<synchronous>, transform_indices = @transform_7, window_bounds = array<i64: 1, 32>}, {pipeline_mode = #tpu.pipeline_mode<synchronous>, transform_indices = @transform_8, window_bounds = array<i64: 1, 32>}, {transform_indices = @transform_9, window_bounds = array<i64: 1, 8, 32>}, {transform_indices = @transform_10, window_bounds = array<i64: 1, 8, 32>}, {transform_indices = @transform_11, window_bounds = array<i64: 1, 8, 32>}]} {
    %c0 = arith.constant 0 : index
    %c0_0 = arith.constant 0 : index
    %c0_1 = arith.constant 0 : index
    %0 = vector.load %arg2[%c0, %c0_0, %c0_1] : memref<1x8x32xf32, #tpu.memory_space<vmem>>, vector<1x8x32xf32>
    %1 = vector.shape_cast %0 : vector<1x8x32xf32> to vector<8x32xf32>
    %c0_2 = arith.constant 0 : index
    %c0_3 = arith.constant 0 : index
    %2 = vector.load %arg3[%c0_2, %c0_3] : memref<1x32xf32, #tpu.memory_space<vmem>>, vector<1x32xf32>
    %3 = vector.shape_cast %2 : vector<1x32xf32> to vector<32xf32>
    %c0_4 = arith.constant 0 : index
    %c0_5 = arith.constant 0 : index
    %4 = vector.load %arg4[%c0_4, %c0_5] : memref<1x32xf32, #tpu.memory_space<vmem>>, vector<1x32xf32>
    %5 = vector.shape_cast %4 : vector<1x32xf32> to vector<32xf32>
    %cst = arith.constant dense<0.000000e+00> : vector<8xf32>
    %6 = vector.multi_reduction <add>, %1, %cst [1] : vector<8x32xf32> to vector<8xf32>
    %7 = vector.shape_cast %6 : vector<8xf32> to vector<8x1xf32>
    %cst_6 = arith.constant 3.200000e+01 : f32
    %8 = vector.broadcast %cst_6 : f32 to vector<8x1xf32>
    %9 = arith.divf %7, %8 : vector<8x1xf32>
    %10 = vector.broadcast %9 : vector<8x1xf32> to vector<8x32xf32>
    %11 = arith.subf %1, %10 : vector<8x32xf32>
    %12 = arith.mulf %11, %11 : vector<8x32xf32>
    %cst_7 = arith.constant dense<0.000000e+00> : vector<8xf32>
    %13 = vector.multi_reduction <add>, %12, %cst_7 [1] : vector<8x32xf32> to vector<8xf32>
    %14 = vector.shape_cast %13 : vector<8xf32> to vector<8x1xf32>
    %cst_8 = arith.constant 3.200000e+01 : f32
    %15 = vector.broadcast %cst_8 : f32 to vector<8x1xf32>
    %16 = arith.divf %14, %15 : vector<8x1xf32>
    %17 = vector.broadcast %9 : vector<8x1xf32> to vector<8x32xf32>
    %18 = arith.subf %1, %17 : vector<8x32xf32>
    %cst_9 = arith.constant 9.99999974E-6 : f32
    %19 = vector.broadcast %cst_9 : f32 to vector<8x1xf32>
    %20 = arith.addf %16, %19 : vector<8x1xf32>
    %21 = math.rsqrt %20 : vector<8x1xf32>
    %22 = vector.broadcast %21 : vector<8x1xf32> to vector<8x32xf32>
    %23 = arith.mulf %18, %22 : vector<8x32xf32>
    %24 = vector.shape_cast %3 : vector<32xf32> to vector<1x32xf32>
    %25 = vector.broadcast %24 : vector<1x32xf32> to vector<8x32xf32>
    %26 = arith.mulf %23, %25 : vector<8x32xf32>
    %27 = vector.shape_cast %5 : vector<32xf32> to vector<1x32xf32>
    %28 = vector.broadcast %27 : vector<1x32xf32> to vector<8x32xf32>
    %29 = arith.addf %26, %28 : vector<8x32xf32>
    %30 = arith.truncf %29 : vector<8x32xf32> to vector<8x32xbf16>
    %c0_10 = arith.constant 0 : index
    %c0_11 = arith.constant 0 : index
    %31 = vector.load %arg5[%c0_10, %c0_11] : memref<32x32xbf16, #tpu.memory_space<vmem>>, vector<32x32xbf16>
    %cst_12 = arith.constant dense<0.000000e+00> : vector<8x32xf32>
    %32 = tpu.matmul %30, %31, %cst_12 {dimension_numbers = #tpu.dot_dimension_numbers<[1], [0], [0], [1], [0, 0, 1, 1], [], []>} : vector<8x32xbf16>, vector<32x32xbf16>, vector<8x32xf32> -> vector<8x32xf32>
    %c0_13 = arith.constant 0 : index
    %c0_14 = arith.constant 0 : index
    %33 = vector.load %arg8[%c0_13, %c0_14] : memref<1x32xf32, #tpu.memory_space<vmem>>, vector<1x32xf32>
    %34 = vector.shape_cast %33 : vector<1x32xf32> to vector<32xf32>
    %35 = vector.shape_cast %34 : vector<32xf32> to vector<1x32xf32>
    %36 = vector.broadcast %35 : vector<1x32xf32> to vector<8x32xf32>
    %37 = arith.addf %32, %36 : vector<8x32xf32>
    %38 = arith.truncf %37 : vector<8x32xf32> to vector<8x32xbf16>
    %c0_15 = arith.constant 0 : index
    %c0_16 = arith.constant 0 : index
    %c0_17 = arith.constant 0 : index
    %39 = vector.load %arg11[%c0_15, %c0_16, %c0_17] : memref<1x8x32xbf16, #tpu.memory_space<vmem>>, vector<1x8x32xbf16>
    %40 = vector.shape_cast %39 : vector<1x8x32xbf16> to vector<8x32xbf16>
    %41 = vector.shape_cast %38 : vector<8x32xbf16> to vector<1x8x32xbf16>
    tpu.vector_store %arg11[%c0_15, %c0_16, %c0_17], %41 {strides = array<i32>} : memref<1x8x32xbf16, #tpu.memory_space<vmem>>, vector<1x8x32xbf16>,
    %c0_18 = arith.constant 0 : index
    %c0_19 = arith.constant 0 : index
    %42 = vector.load %arg6[%c0_18, %c0_19] : memref<32x32xbf16, #tpu.memory_space<vmem>>, vector<32x32xbf16>
    %cst_20 = arith.constant dense<0.000000e+00> : vector<8x32xf32>
    %43 = tpu.matmul %30, %42, %cst_20 {dimension_numbers = #tpu.dot_dimension_numbers<[1], [0], [0], [1], [0, 0, 1, 1], [], []>} : vector<8x32xbf16>, vector<32x32xbf16>, vector<8x32xf32> -> vector<8x32xf32>
    %c0_21 = arith.constant 0 : index
    %c0_22 = arith.constant 0 : index
    %44 = vector.load %arg9[%c0_21, %c0_22] : memref<1x32xf32, #tpu.memory_space<vmem>>, vector<1x32xf32>
    %45 = vector.shape_cast %44 : vector<1x32xf32> to vector<32xf32>
    %46 = vector.shape_cast %45 : vector<32xf32> to vector<1x32xf32>
    %47 = vector.broadcast %46 : vector<1x32xf32> to vector<8x32xf32>
    %48 = arith.addf %43, %47 : vector<8x32xf32>
    %49 = arith.truncf %48 : vector<8x32xf32> to vector<8x32xbf16>
    %c0_23 = arith.constant 0 : index
    %c0_24 = arith.constant 0 : index
    %c0_25 = arith.constant 0 : index
    %50 = vector.load %arg12[%c0_23, %c0_24, %c0_25] : memref<1x8x32xbf16, #tpu.memory_space<vmem>>, vector<1x8x32xbf16>
    %51 = vector.shape_cast %50 : vector<1x8x32xbf16> to vector<8x32xbf16>
    %52 = vector.shape_cast %49 : vector<8x32xbf16> to vector<1x8x32xbf16>
    tpu.vector_store %arg12[%c0_23, %c0_24, %c0_25], %52 {strides = array<i32>} : memref<1x8x32xbf16, #tpu.memory_space<vmem>>, vector<1x8x32xbf16>,
    %c0_26 = arith.constant 0 : index
    %c0_27 = arith.constant 0 : index
    %53 = vector.load %arg7[%c0_26, %c0_27] : memref<32x32xbf16, #tpu.memory_space<vmem>>, vector<32x32xbf16>
    %cst_28 = arith.constant dense<0.000000e+00> : vector<8x32xf32>
    %54 = tpu.matmul %30, %53, %cst_28 {dimension_numbers = #tpu.dot_dimension_numbers<[1], [0], [0], [1], [0, 0, 1, 1], [], []>} : vector<8x32xbf16>, vector<32x32xbf16>, vector<8x32xf32> -> vector<8x32xf32>
    %c0_29 = arith.constant 0 : index
    %c0_30 = arith.constant 0 : index
    %55 = vector.load %arg10[%c0_29, %c0_30] : memref<1x32xf32, #tpu.memory_space<vmem>>, vector<1x32xf32>
    %56 = vector.shape_cast %55 : vector<1x32xf32> to vector<32xf32>
    %57 = vector.shape_cast %56 : vector<32xf32> to vector<1x32xf32>
    %58 = vector.broadcast %57 : vector<1x32xf32> to vector<8x32xf32>
    %59 = arith.addf %54, %58 : vector<8x32xf32>
    %60 = arith.truncf %59 : vector<8x32xf32> to vector<8x32xbf16>
    %c0_31 = arith.constant 0 : index
    %c0_32 = arith.constant 0 : index
    %c0_33 = arith.constant 0 : index
    %61 = vector.load %arg13[%c0_31, %c0_32, %c0_33] : memref<1x8x32xbf16, #tpu.memory_space<vmem>>, vector<1x8x32xbf16>
    %62 = vector.shape_cast %61 : vector<1x8x32xbf16> to vector<8x32xbf16>
    %63 = vector.shape_cast %60 : vector<8x32xbf16> to vector<1x8x32xbf16>
    tpu.vector_store %arg13[%c0_31, %c0_32, %c0_33], %63 {strides = array<i32>} : memref<1x8x32xbf16, #tpu.memory_space<vmem>>, vector<1x8x32xbf16>,
    return
  }
  func.func @transform_0(%arg0: i32, %arg1: i32) -> (i32, i32, i32) {
    %c0_i32 = arith.constant 0 : i32
    %c0_i32_0 = arith.constant 0 : i32
    return %arg0, %arg1, %c0_i32 : i32, i32, i32
  }
  func.func @transform_1(%arg0: i32, %arg1: i32) -> (i32, i32) {
    %c0_i32 = arith.constant 0 : i32
    %c0_i32_0 = arith.constant 0 : i32
    %c0_i32_1 = arith.constant 0 : i32
    return %c0_i32, %c0_i32_0 : i32, i32
  }
  func.func @transform_2(%arg0: i32, %arg1: i32) -> (i32, i32) {
    %c0_i32 = arith.constant 0 : i32
    %c0_i32_0 = arith.constant 0 : i32
    %c0_i32_1 = arith.constant 0 : i32
    return %c0_i32, %c0_i32_0 : i32, i32
  }
  func.func @transform_3(%arg0: i32, %arg1: i32) -> (i32, i32) {
    %c0_i32 = arith.constant 0 : i32
    %c0_i32_0 = arith.constant 0 : i32
    %c0_i32_1 = arith.constant 0 : i32
    return %c0_i32, %c0_i32_0 : i32, i32
  }
  func.func @transform_4(%arg0: i32, %arg1: i32) -> (i32, i32) {
    %c0_i32 = arith.constant 0 : i32
    %c0_i32_0 = arith.constant 0 : i32
    %c0_i32_1 = arith.constant 0 : i32
    return %c0_i32, %c0_i32_0 : i32, i32
  }
  func.func @transform_5(%arg0: i32, %arg1: i32) -> (i32, i32) {
    %c0_i32 = arith.constant 0 : i32
    %c0_i32_0 = arith.constant 0 : i32
    %c0_i32_1 = arith.constant 0 : i32
    return %c0_i32, %c0_i32_0 : i32, i32
  }
  func.func @transform_6(%arg0: i32, %arg1: i32) -> (i32, i32) {
    %c0_i32 = arith.constant 0 : i32
    %c0_i32_0 = arith.constant 0 : i32
    %c0_i32_1 = arith.constant 0 : i32
    return %c0_i32, %c0_i32_0 : i32, i32
  }
  func.func @transform_7(%arg0: i32, %arg1: i32) -> (i32, i32) {
    %c0_i32 = arith.constant 0 : i32
    %c0_i32_0 = arith.constant 0 : i32
    %c0_i32_1 = arith.constant 0 : i32
    return %c0_i32, %c0_i32_0 : i32, i32
  }
  func.func @transform_8(%arg0: i32, %arg1: i32) -> (i32, i32) {
    %c0_i32 = arith.constant 0 : i32
    %c0_i32_0 = arith.constant 0 : i32
    %c0_i32_1 = arith.constant 0 : i32
    return %c0_i32, %c0_i32_0 : i32, i32
  }
  func.func @transform_9(%arg0: i32, %arg1: i32) -> (i32, i32, i32) {
    %c0_i32 = arith.constant 0 : i32
    %c0_i32_0 = arith.constant 0 : i32
    return %arg0, %arg1, %c0_i32 : i32, i32, i32
  }
  func.func @transform_10(%arg0: i32, %arg1: i32) -> (i32, i32, i32) {
    %c0_i32 = arith.constant 0 : i32
    %c0_i32_0 = arith.constant 0 : i32
    return %arg0, %arg1, %c0_i32 : i32, i32, i32
  }
  func.func @transform_11(%arg0: i32, %arg1: i32) -> (i32, i32, i32) {
    %c0_i32 = arith.constant 0 : i32
    %c0_i32_0 = arith.constant 0 : i32
    return %arg0, %arg1, %c0_i32 : i32, i32, i32
  }
}

</mosaic_0001>

<llo_original>
// kernel: tpu_custom_call.1
$region0: #{tpu_custom_call.1}
  #allocation0 [shape = 'u32[]', space=smem, size = 0x4, offset = 0x4, fixed_abs, tag = 'smem constant byte address 0x4 - core index']
  #allocation1 [shape = 'u32[72,128]{1,0:T(1,128)}', space=vmem, size = 0x9000, scoped, tag = 'internal scratch']
  %s0 = inlined_call_operand.hbm [shape: f32[8,128], index: 0, kind: input, shape index: {}]
  %s1 = inlined_call_operand.hbm [shape: f32[8,128], index: 1, kind: output, shape index: {}]
  %s2 = sld [smem:[#allocation0]]
  $region41: #{tpu_custom_call.1} parent=0
    _
  %s4 = ssub.s32 1, %s2
  %s5 = scalar_select 0, %s4, %s2
  $region1: #{tpu_custom_call.1} parent=0
    #allocation2 [shape = 'u8[4096]{0}', space=vmem, size = 0x1000, scoped, tag = 'input window, operand 0, single buffered']
    #allocation3 [shape = 's32[2]{0}', space=sflag, size = 0x8, scoped, tag = 'scoped memory for tpu_custom_call.1']
    #allocation4 [shape = 's32[2]{0}', space=sflag, size = 0x8, scoped, tag = 'scoped memory for tpu_custom_call.1']
    #allocation5 [shape = 'u8[4096]{0}', space=vmem, size = 0x1000, scoped, tag = 'output window, operand 0, single buffered']
    %6 = vsyncpa [#allocation3], 0
    %7 = vsyncpa [#allocation4], 0
    loop: start=0, step=1, limit=4
    $region2: #{tpu_custom_call.1} parent=1 // loop_pre_header
      _
    $region3: #{tpu_custom_call.1} parent=1 // loop_header
      %s9 = sphi 0, %s13
      %p10 = scmp.ge.s32.totalorder %s9, 4
      %s17 = sphi 0, %s17
      %s19 = sphi 0, %s17
      %s20 = sphi 0, %s19
      %s34 = sphi 0, %s20
      %s38 = sphi 0, %s38
      %s40 = sphi 0, %s38
      %s41 = sphi 0, %s40
      %s55 = sphi 0, %s41
    $region4: #{tpu_custom_call.1} parent=1 // loop_header_branch
      %12 = sbr.rel (%p10) target = $region8
    $region5: #{tpu_custom_call.1} parent=1 // loop_body
      %s14 = ssub.s32 %s9, 1
      %s15 = ssub.s32 %s9, 2
      %s16 = sadd.s32 %s9, 1
      %s18 = sadd.s32 %s17, 1
      %p21 = scmp.eq.s32.totalorder %s9, 1
      %p22 = scmp.ne.s32.totalorder %s17, %s19
      %p23 = scmp.eq.s32.totalorder %s9, 0
      %p24 = por %p22, %p23
      %p25 = scmp.ne.s32.totalorder %s17, %s19
      %p26 = scmp.eq.s32.totalorder %s14, 1
      %p27 = por %p25, %p26
      %p28 = scmp.ne.s32.totalorder %s19, %s20
      %p29 = scmp.eq.s32.totalorder %s14, 0
      %p30 = por %p28, %p29
      %p31 = scmp.ne.s32.totalorder %s19, %s20
      %p32 = scmp.eq.s32.totalorder %s15, 1
      %p33 = por %p31, %p32
      %p35 = scmp.ne.s32.totalorder %s20, %s34
      %p36 = scmp.eq.s32.totalorder %s15, 0
      %p37 = por %p35, %p36
      %s39 = sadd.s32 %s38, 1
      %p42 = scmp.eq.s32.totalorder %s9, 1
      %p43 = scmp.ne.s32.totalorder %s38, %s40
      %p44 = scmp.eq.s32.totalorder %s9, 0
      %p45 = por %p43, %p44
      %p46 = scmp.ne.s32.totalorder %s38, %s40
      %p47 = scmp.eq.s32.totalorder %s14, 1
      %p48 = por %p46, %p47
      %p49 = scmp.ne.s32.totalorder %s40, %s41
      %p50 = scmp.eq.s32.totalorder %s14, 0
      %p51 = por %p49, %p50
      %p52 = scmp.ne.s32.totalorder %s40, %s41
      %p53 = scmp.eq.s32.totalorder %s15, 1
      %p54 = por %p52, %p53
      %p56 = scmp.ne.s32.totalorder %s41, %s55
      %p57 = scmp.eq.s32.totalorder %s15, 0
      %p58 = por %p56, %p57
      %p59 = scmp.le.s32.totalorder 1, %s9
      %p60 = scmp.lt.s32.totalorder %s9, 3
      %p61 = pnand %p59, %p60
      %p62 = pneg %p61
      // Predicated region
      $region9: #{tpu_custom_call.1} parent=5 // pred_check
        _
      $region10: #{tpu_custom_call.1} parent=5 // pred_check_branch
        %64 = sbr.rel (%p61) target = $region12
      $region11: #{tpu_custom_call.1} parent=5 // pred_region
        %s65 = ssub.s32 %s9, 1
        // Predicated region
        $region13: #{tpu_custom_call.1} parent=11 // pred_check
          %p66 = pneg %p30
        $region14: #{tpu_custom_call.1} parent=11 // pred_check_branch
          %68 = sbr.rel (%p66) target = $region16
        $region15: #{tpu_custom_call.1} parent=11 // pred_region
          %70 = vsyncadd [#allocation3], 0
          %s72 = sshll.u32 %s0, 4
          %s73 = int_to_ptr.hbm [resolvable:$true] %s72
          %s74 = sshll.u32 [#allocation2], 4
          %s75 = int_to_ptr.vmem [resolvable:$true] %s74
          %77 = dma.hbm_to_vmem [thread:$0]  %s73, 128, %s75, [#allocation3]
        $region16: #{tpu_custom_call.1} parent=11 // pred_fallthru
          _
      $region12: #{tpu_custom_call.1} parent=5 // pred_fallthru
        _
      %p78 = scmp.lt.s32.totalorder %s9, 2
      // Predicated region
      $region17: #{tpu_custom_call.1} parent=5 // pred_check
        %p79 = pneg %p78
      $region18: #{tpu_custom_call.1} parent=5 // pred_check_branch
        %81 = sbr.rel (%p79) target = $region20
      $region19: #{tpu_custom_call.1} parent=5 // pred_region
        _
      $region20: #{tpu_custom_call.1} parent=5 // pred_fallthru
        _
      %p82 = scmp.le.s32.totalorder 1, %s9
      %p83 = scmp.lt.s32.totalorder %s9, 3
      %p84 = pnand %p82, %p83
      %p85 = pneg %p84
      // Predicated region
      $region21: #{tpu_custom_call.1} parent=5 // pred_check
        _
      $region22: #{tpu_custom_call.1} parent=5 // pred_check_branch
        %87 = sbr.rel (%p84) target = $region24
      $region23: #{tpu_custom_call.1} parent=5 // pred_region
        %s88 = ssub.s32 %s9, 1
        // Predicated region
        $region25: #{tpu_custom_call.1} parent=23 // pred_check
          %p89 = pneg %p30
        $region26: #{tpu_custom_call.1} parent=23 // pred_check_branch
          %91 = sbr.rel (%p89) target = $region28
        $region27: #{tpu_custom_call.1} parent=23 // pred_region
          %93 = dma.done [#allocation3], 128
        $region28: #{tpu_custom_call.1} parent=23 // pred_fallthru
          _
        %p94 = pneg %p30
        %p95 = pneg %p27
        %p96 = pneg %p51
        %p97 = pneg %p48
        %v98 = vld [vmem:[#allocation2] sm:$0xff]
        %99 = vst [vmem:[#allocation5] sm:$0xff] %v98
        // Predicated region
        $region29: #{tpu_custom_call.1} parent=23 // pred_check
          %p100 = pneg %p48
        $region30: #{tpu_custom_call.1} parent=23 // pred_check_branch
          %102 = sbr.rel (%p100) target = $region32
        $region31: #{tpu_custom_call.1} parent=23 // pred_region
          %104 = vsyncadd [#allocation4], 0
          %s106 = sshll.u32 [#allocation5], 4
          %s107 = int_to_ptr.vmem [resolvable:$true] %s106
          %s108 = sshll.u32 %s1, 4
          %s109 = int_to_ptr.hbm [resolvable:$true] %s108
          %111 = dma.vmem_to_hbm [thread:$0]  %s107, 128, %s109, [#allocation4]
        $region32: #{tpu_custom_call.1} parent=23 // pred_fallthru
          _
        // Predicated region
        $region33: #{tpu_custom_call.1} parent=23 // pred_check
          %p112 = pneg %p48
        $region34: #{tpu_custom_call.1} parent=23 // pred_check_branch
          %114 = sbr.rel (%p112) target = $region36
        $region35: #{tpu_custom_call.1} parent=23 // pred_region
          %116 = dma.done [#allocation4], 128
        $region36: #{tpu_custom_call.1} parent=23 // pred_fallthru
          _
      $region24: #{tpu_custom_call.1} parent=5 // pred_fallthru
        _
      %p117 = scmp.le.s32.totalorder 2, %s9
      // Predicated region
      $region37: #{tpu_custom_call.1} parent=5 // pred_check
        %p118 = pneg %p117
      $region38: #{tpu_custom_call.1} parent=5 // pred_check_branch
        %120 = sbr.rel (%p118) target = $region40
      $region39: #{tpu_custom_call.1} parent=5 // pred_region
        %s121 = ssub.s32 %s9, 2
      $region40: #{tpu_custom_call.1} parent=5 // pred_fallthru
        _
    $region6: #{tpu_custom_call.1} parent=1 // loop_footer
      %s13 = sadd.s32 1, %s9
    $region7: #{tpu_custom_call.1} parent=1 // loop_footer_branch
      %8 = sbr.rel target = $region3
    $region8: #{tpu_custom_call.1} parent=1 // loop_exit
      _
    %122 = vsyncpa [#allocation3], 1
    %s123 = scalar_lea.sflag [#allocation3], 1
    %124 = vsyncpa %s123, 1
    %125 = vsyncpa [#allocation4], 1
    %s126 = scalar_lea.sflag [#allocation4], 1
    %127 = vsyncpa %s126, 1

// kernel: tpu_custom_call.1
$region0: #{tpu_custom_call.1}
  #allocation0 [shape = 'u32[]', space=smem, size = 0x4, offset = 0x4, fixed_abs, tag = 'smem constant byte address 0x4 - core index']
  #allocation1 [shape = 'u32[72,128]{1,0:T(1,128)}', space=vmem, size = 0x9000, scoped, tag = 'internal scratch']
  %s0 = inlined_call_operand.hbm [shape: f32[2,8,32], index: 0, kind: input, shape index: {}]
  %s1 = inlined_call_operand.hbm [shape: f32[1,32], index: 1, kind: input, shape index: {}]
  %s2 = inlined_call_operand.vmem [shape: f32[1,32], index: 2, kind: input, shape index: {}]
  %s3 = inlined_call_operand.hbm [shape: bf16[32,32], index: 3, kind: input, shape index: {}]
  %s4 = inlined_call_operand.hbm [shape: bf16[32,32], index: 4, kind: input, shape index: {}]
  %s5 = inlined_call_operand.hbm [shape: bf16[32,32], index: 5, kind: input, shape index: {}]
  %s6 = inlined_call_operand.vmem [shape: f32[1,32], index: 6, kind: input, shape index: {}]
  %s7 = inlined_call_operand.vmem [shape: f32[1,32], index: 7, kind: input, shape index: {}]
  %s8 = inlined_call_operand.vmem [shape: f32[1,32], index: 8, kind: input, shape index: {}]
  %s9 = inlined_call_operand.hbm [shape: bf16[2,8,32], index: 9, kind: output, shape index: {0}]
  %s10 = inlined_call_operand.hbm [shape: bf16[2,8,32], index: 10, kind: output, shape index: {1}]
  %s11 = inlined_call_operand.hbm [shape: bf16[2,8,32], index: 11, kind: output, shape index: {2}]
  %12 = xla_tuple %s9, %s10, %s11
  %s13 = sld [smem:[#allocation0]]
  $region105: #{tpu_custom_call.1} parent=0
    _
  %s15 = ssub.s32 1, %s13
  %s16 = scalar_select 0, %s15, %s13
  $region1: #{tpu_custom_call.1} parent=0
    #allocation2 [shape = 'u8[8192]{0}', space=vmem, size = 0x2000, scoped, tag = 'input window, operand 0']
    #allocation3 [shape = 's32[2]{0}', space=sflag, size = 0x8, scoped, tag = 'scoped memory for tpu_custom_call.1']
    #allocation4 [shape = 's32[2]{0}', space=sflag, size = 0x8, scoped, tag = 'scoped memory for tpu_custom_call.1']
    #allocation5 [shape = 'u8[512]{0}', space=vmem, size = 0x400, scoped, tag = 'input window, operand 1, single buffered']
    #allocation6 [shape = 's32[1]{0}', space=sflag, size = 0x4, scoped, tag = 'scoped memory for tpu_custom_call.1']
    #allocation7 [shape = 'u8[8192]{0}', space=vmem, size = 0x2000, scoped, tag = 'input window, operand 3, single buffered']
    #allocation8 [shape = 'u8[8192]{0}', space=vmem, size = 0x2000, scoped, tag = 'input window, operand 4, single buffered']
    #allocation9 [shape = 's32[1]{0}', space=sflag, size = 0x4, scoped, tag = 'scoped memory for tpu_custom_call.1']
    #allocation10 [shape = 'u8[8192]{0}', space=vmem, size = 0x2000, scoped, tag = 'input window, operand 5, single buffered']
    #allocation11 [shape = 'u8[4096]{0}', space=vmem, size = 0x1000, scoped, tag = 'output window, operand 0']
    #allocation12 [shape = 'u8[4096]{0}', space=vmem, size = 0x1000, scoped, tag = 'output window, operand 1']
    #allocation13 [shape = 's32[2]{0}', space=sflag, size = 0x8, scoped, tag = 'scoped memory for tpu_custom_call.1']
    #allocation14 [shape = 'u8[4096]{0}', space=vmem, size = 0x1000, scoped, tag = 'output window, operand 2']
    %17 = vsyncpa [#allocation3], 0
    %s18 = scalar_lea.sflag [#allocation3], 1
    %19 = vsyncpa %s18, 0
    %20 = vsyncpa [#allocation6], 0
    %21 = vsyncpa [#allocation9], 0
    %22 = vsyncpa [#allocation4], 0
    %s23 = scalar_lea.sflag [#allocation4], 1
    %24 = vsyncpa %s23, 0
    %25 = vsyncpa [#allocation13], 0
    %s26 = scalar_lea.sflag [#allocation13], 1
    %27 = vsyncpa %s26, 0
    loop: start=0, step=1, limit=4
    $region2: #{tpu_custom_call.1} parent=1 // loop_pre_header
      _
    $region3: #{tpu_custom_call.1} parent=1 // loop_header
      %s29 = sphi 0, %s33
      %p30 = scmp.ge.s32.totalorder %s29, 4
      %s36 = sphi 0, %s48
      %s37 = sphi 0, %s44
      %s38 = sphi 0, %s36
      %s39 = sphi 0, %s37
      %s40 = sphi 0, %s38
      %s41 = sphi 0, %s39
      %s53 = sphi 0, %s55
      %s56 = sphi 0, %s53
      %s57 = sphi 0, %s56
      %s73 = sphi 0, %s57
      %s77 = sphi 0, %s77
      %s79 = sphi 0, %s77
      %s80 = sphi 0, %s79
      %s94 = sphi 0, %s80
      %s98 = sphi 0, %s98
      %s100 = sphi 0, %s98
      %s101 = sphi 0, %s100
      %s115 = sphi 0, %s101
      %s119 = sphi 0, %s119
      %s121 = sphi 0, %s119
      %s122 = sphi 0, %s121
      %s136 = sphi 0, %s122
      %s140 = sphi 0, %s140
      %s142 = sphi 0, %s140
      %s143 = sphi 0, %s142
      %s157 = sphi 0, %s143
      %s161 = sphi 0, %s161
      %s163 = sphi 0, %s161
      %s164 = sphi 0, %s163
      %s178 = sphi 0, %s164
      %s182 = sphi 0, %s182
      %s184 = sphi 0, %s182
      %s185 = sphi 0, %s184
      %s199 = sphi 0, %s185
      %s203 = sphi 0, %s203
      %s205 = sphi 0, %s203
      %s206 = sphi 0, %s205
      %s220 = sphi 0, %s206
      %s224 = sphi 0, %s224
      %s226 = sphi 0, %s224
      %s227 = sphi 0, %s226
      %s241 = sphi 0, %s227
      %s249 = sphi 0, %s251
      %s252 = sphi 0, %s249
      %s253 = sphi 0, %s252
      %s269 = sphi 0, %s253
      %s277 = sphi 0, %s279
      %s280 = sphi 0, %s277
      %s281 = sphi 0, %s280
      %s297 = sphi 0, %s281
      %s305 = sphi 0, %s307
      %s308 = sphi 0, %s305
      %s309 = sphi 0, %s308
      %s325 = sphi 0, %s309
    $region4: #{tpu_custom_call.1} parent=1 // loop_header_branch
      %32 = sbr.rel (%p30) target = $region8
    $region5: #{tpu_custom_call.1} parent=1 // loop_body
      %s34 = ssub.s32 %s29, 1
      %s35 = ssub.s32 %s29, 2
      %s42 = sadd.s32 1, %s37
      %p43 = scmp.ge.s32.totalorder %s42, 1
      %s44 = scalar_select %p43, 0, %s42
      %s45 = sadd.s32 1, %s36
      %s46 = scalar_select %p43, %s45, %s36
      %p47 = scmp.ge.s32.totalorder %s46, 2
      %s48 = scalar_select %p47, 0, %s46
      %s49 = ssub.s32 %s36, %s48
      %s50 = ssub.s32 %s37, %s44
      %s51 = sor.u32 %s49, %s50
      %p52 = scmp.eq.s32.totalorder %s51, 0
      %s54 = sadd.s32 %s53, 1
      %s55 = scalar_select %p52, %s53, %s54
      %p58 = pneg %p52
      %p59 = scmp.eq.s32.totalorder %s29, 1
      %p60 = por %p58, %p59
      %p61 = scmp.ne.s32.totalorder %s53, %s56
      %p62 = scmp.eq.s32.totalorder %s29, 0
      %p63 = por %p61, %p62
      %p64 = scmp.ne.s32.totalorder %s53, %s56
      %p65 = scmp.eq.s32.totalorder %s34, 1
      %p66 = por %p64, %p65
      %p67 = scmp.ne.s32.totalorder %s56, %s57
      %p68 = scmp.eq.s32.totalorder %s34, 0
      %p69 = por %p67, %p68
      %p70 = scmp.ne.s32.totalorder %s56, %s57
      %p71 = scmp.eq.s32.totalorder %s35, 1
      %p72 = por %p70, %p71
      %p74 = scmp.ne.s32.totalorder %s57, %s73
      %p75 = scmp.eq.s32.totalorder %s35, 0
      %p76 = por %p74, %p75
      %s78 = sadd.s32 %s77, 1
      %p81 = scmp.eq.s32.totalorder %s29, 1
      %p82 = scmp.ne.s32.totalorder %s77, %s79
      %p83 = scmp.eq.s32.totalorder %s29, 0
      %p84 = por %p82, %p83
      %p85 = scmp.ne.s32.totalorder %s77, %s79
      %p86 = scmp.eq.s32.totalorder %s34, 1
      %p87 = por %p85, %p86
      %p88 = scmp.ne.s32.totalorder %s79, %s80
      %p89 = scmp.eq.s32.totalorder %s34, 0
      %p90 = por %p88, %p89
      %p91 = scmp.ne.s32.totalorder %s79, %s80
      %p92 = scmp.eq.s32.totalorder %s35, 1
      %p93 = por %p91, %p92
      %p95 = scmp.ne.s32.totalorder %s80, %s94
      %p96 = scmp.eq.s32.totalorder %s35, 0
      %p97 = por %p95, %p96
      %s99 = sadd.s32 %s98, 1
      %p102 = scmp.eq.s32.totalorder %s29, 1
      %p103 = scmp.ne.s32.totalorder %s98, %s100
      %p104 = scmp.eq.s32.totalorder %s29, 0
      %p105 = por %p103, %p104
      %p106 = scmp.ne.s32.totalorder %s98, %s100
      %p107 = scmp.eq.s32.totalorder %s34, 1
      %p108 = por %p106, %p107
      %p109 = scmp.ne.s32.totalorder %s100, %s101
      %p110 = scmp.eq.s32.totalorder %s34, 0
      %p111 = por %p109, %p110
      %p112 = scmp.ne.s32.totalorder %s100, %s101
      %p113 = scmp.eq.s32.totalorder %s35, 1
      %p114 = por %p112, %p113
      %p116 = scmp.ne.s32.totalorder %s101, %s115
      %p117 = scmp.eq.s32.totalorder %s35, 0
      %p118 = por %p116, %p117
      %s120 = sadd.s32 %s119, 1
      %p123 = scmp.eq.s32.totalorder %s29, 1
      %p124 = scmp.ne.s32.totalorder %s119, %s121
      %p125 = scmp.eq.s32.totalorder %s29, 0
      %p126 = por %p124, %p125
      %p127 = scmp.ne.s32.totalorder %s119, %s121
      %p128 = scmp.eq.s32.totalorder %s34, 1
      %p129 = por %p127, %p128
      %p130 = scmp.ne.s32.totalorder %s121, %s122
      %p131 = scmp.eq.s32.totalorder %s34, 0
      %p132 = por %p130, %p131
      %p133 = scmp.ne.s32.totalorder %s121, %s122
      %p134 = scmp.eq.s32.totalorder %s35, 1
      %p135 = por %p133, %p134
      %p137 = scmp.ne.s32.totalorder %s122, %s136
      %p138 = scmp.eq.s32.totalorder %s35, 0
      %p139 = por %p137, %p138
      %s141 = sadd.s32 %s140, 1
      %p144 = scmp.eq.s32.totalorder %s29, 1
      %p145 = scmp.ne.s32.totalorder %s140, %s142
      %p146 = scmp.eq.s32.totalorder %s29, 0
      %p147 = por %p145, %p146
      %p148 = scmp.ne.s32.totalorder %s140, %s142
      %p149 = scmp.eq.s32.totalorder %s34, 1
      %p150 = por %p148, %p149
      %p151 = scmp.ne.s32.totalorder %s142, %s143
      %p152 = scmp.eq.s32.totalorder %s34, 0
      %p153 = por %p151, %p152
      %p154 = scmp.ne.s32.totalorder %s142, %s143
      %p155 = scmp.eq.s32.totalorder %s35, 1
      %p156 = por %p154, %p155
      %p158 = scmp.ne.s32.totalorder %s143, %s157
      %p159 = scmp.eq.s32.totalorder %s35, 0
      %p160 = por %p158, %p159
      %s162 = sadd.s32 %s161, 1
      %p165 = scmp.eq.s32.totalorder %s29, 1
      %p166 = scmp.ne.s32.totalorder %s161, %s163
      %p167 = scmp.eq.s32.totalorder %s29, 0
      %p168 = por %p166, %p167
      %p169 = scmp.ne.s32.totalorder %s161, %s163
      %p170 = scmp.eq.s32.totalorder %s34, 1
      %p171 = por %p169, %p170
      %p172 = scmp.ne.s32.totalorder %s163, %s164
      %p173 = scmp.eq.s32.totalorder %s34, 0
      %p174 = por %p172, %p173
      %p175 = scmp.ne.s32.totalorder %s163, %s164
      %p176 = scmp.eq.s32.totalorder %s35, 1
      %p177 = por %p175, %p176
      %p179 = scmp.ne.s32.totalorder %s164, %s178
      %p180 = scmp.eq.s32.totalorder %s35, 0
      %p181 = por %p179, %p180
      %s183 = sadd.s32 %s182, 1
      %p186 = scmp.eq.s32.totalorder %s29, 1
      %p187 = scmp.ne.s32.totalorder %s182, %s184
      %p188 = scmp.eq.s32.totalorder %s29, 0
      %p189 = por %p187, %p188
      %p190 = scmp.ne.s32.totalorder %s182, %s184
      %p191 = scmp.eq.s32.totalorder %s34, 1
      %p192 = por %p190, %p191
      %p193 = scmp.ne.s32.totalorder %s184, %s185
      %p194 = scmp.eq.s32.totalorder %s34, 0
      %p195 = por %p193, %p194
      %p196 = scmp.ne.s32.totalorder %s184, %s185
      %p197 = scmp.eq.s32.totalorder %s35, 1
      %p198 = por %p196, %p197
      %p200 = scmp.ne.s32.totalorder %s185, %s199
      %p201 = scmp.eq.s32.totalorder %s35, 0
      %p202 = por %p200, %p201
      %s204 = sadd.s32 %s203, 1
      %p207 = scmp.eq.s32.totalorder %s29, 1
      %p208 = scmp.ne.s32.totalorder %s203, %s205
      %p209 = scmp.eq.s32.totalorder %s29, 0
      %p210 = por %p208, %p209
      %p211 = scmp.ne.s32.totalorder %s203, %s205
      %p212 = scmp.eq.s32.totalorder %s34, 1
      %p213 = por %p211, %p212
      %p214 = scmp.ne.s32.totalorder %s205, %s206
      %p215 = scmp.eq.s32.totalorder %s34, 0
      %p216 = por %p214, %p215
      %p217 = scmp.ne.s32.totalorder %s205, %s206
      %p218 = scmp.eq.s32.totalorder %s35, 1
      %p219 = por %p217, %p218
      %p221 = scmp.ne.s32.totalorder %s206, %s220
      %p222 = scmp.eq.s32.totalorder %s35, 0
      %p223 = por %p221, %p222
      %s225 = sadd.s32 %s224, 1
      %p228 = scmp.eq.s32.totalorder %s29, 1
      %p229 = scmp.ne.s32.totalorder %s224, %s226
      %p230 = scmp.eq.s32.totalorder %s29, 0
      %p231 = por %p229, %p230
      %p232 = scmp.ne.s32.totalorder %s224, %s226
      %p233 = scmp.eq.s32.totalorder %s34, 1
      %p234 = por %p232, %p233
      %p235 = scmp.ne.s32.totalorder %s226, %s227
      %p236 = scmp.eq.s32.totalorder %s34, 0
      %p237 = por %p235, %p236
      %p238 = scmp.ne.s32.totalorder %s226, %s227
      %p239 = scmp.eq.s32.totalorder %s35, 1
      %p240 = por %p238, %p239
      %p242 = scmp.ne.s32.totalorder %s227, %s241
      %p243 = scmp.eq.s32.totalorder %s35, 0
      %p244 = por %p242, %p243
      %s245 = ssub.s32 %s36, %s48
      %s246 = ssub.s32 %s37, %s44
      %s247 = sor.u32 %s245, %s246
      %p248 = scmp.eq.s32.totalorder %s247, 0
      %s250 = sadd.s32 %s249, 1
      %s251 = scalar_select %p248, %s249, %s250
      %p254 = pneg %p248
      %p255 = scmp.eq.s32.totalorder %s29, 1
      %p256 = por %p254, %p255
      %p257 = scmp.ne.s32.totalorder %s249, %s252
      %p258 = scmp.eq.s32.totalorder %s29, 0
      %p259 = por %p257, %p258
      %p260 = scmp.ne.s32.totalorder %s249, %s252
      %p261 = scmp.eq.s32.totalorder %s34, 1
      %p262 = por %p260, %p261
      %p263 = scmp.ne.s32.totalorder %s252, %s253
      %p264 = scmp.eq.s32.totalorder %s34, 0
      %p265 = por %p263, %p264
      %p266 = scmp.ne.s32.totalorder %s252, %s253
      %p267 = scmp.eq.s32.totalorder %s35, 1
      %p268 = por %p266, %p267
      %p270 = scmp.ne.s32.totalorder %s253, %s269
      %p271 = scmp.eq.s32.totalorder %s35, 0
      %p272 = por %p270, %p271
      %s273 = ssub.s32 %s36, %s48
      %s274 = ssub.s32 %s37, %s44
      %s275 = sor.u32 %s273, %s274
      %p276 = scmp.eq.s32.totalorder %s275, 0
      %s278 = sadd.s32 %s277, 1
      %s279 = scalar_select %p276, %s277, %s278
      %p282 = pneg %p276
      %p283 = scmp.eq.s32.totalorder %s29, 1
      %p284 = por %p282, %p283
      %p285 = scmp.ne.s32.totalorder %s277, %s280
      %p286 = scmp.eq.s32.totalorder %s29, 0
      %p287 = por %p285, %p286
      %p288 = scmp.ne.s32.totalorder %s277, %s280
      %p289 = scmp.eq.s32.totalorder %s34, 1
      %p290 = por %p288, %p289
      %p291 = scmp.ne.s32.totalorder %s280, %s281
      %p292 = scmp.eq.s32.totalorder %s34, 0
      %p293 = por %p291, %p292
      %p294 = scmp.ne.s32.totalorder %s280, %s281
      %p295 = scmp.eq.s32.totalorder %s35, 1
      %p296 = por %p294, %p295
      %p298 = scmp.ne.s32.totalorder %s281, %s297
      %p299 = scmp.eq.s32.totalorder %s35, 0
      %p300 = por %p298, %p299
      %s301 = ssub.s32 %s36, %s48
      %s302 = ssub.s32 %s37, %s44
      %s303 = sor.u32 %s301, %s302
      %p304 = scmp.eq.s32.totalorder %s303, 0
      %s306 = sadd.s32 %s305, 1
      %s307 = scalar_select %p304, %s305, %s306
      %p310 = pneg %p304
      %p311 = scmp.eq.s32.totalorder %s29, 1
      %p312 = por %p310, %p311
      %p313 = scmp.ne.s32.totalorder %s305, %s308
      %p314 = scmp.eq.s32.totalorder %s29, 0
      %p315 = por %p313, %p314
      %p316 = scmp.ne.s32.totalorder %s305, %s308
      %p317 = scmp.eq.s32.totalorder %s34, 1
      %p318 = por %p316, %p317
      %p319 = scmp.ne.s32.totalorder %s308, %s309
      %p320 = scmp.eq.s32.totalorder %s34, 0
      %p321 = por %p319, %p320
      %p322 = scmp.ne.s32.totalorder %s308, %s309
      %p323 = scmp.eq.s32.totalorder %s35, 1
      %p324 = por %p322, %p323
      %p326 = scmp.ne.s32.totalorder %s309, %s325
      %p327 = scmp.eq.s32.totalorder %s35, 0
      %p328 = por %p326, %p327
      %p329 = scmp.le.s32.totalorder 1, %s29
      %p330 = scmp.lt.s32.totalorder %s29, 3
      %p331 = pnand %p329, %p330
      %p332 = pneg %p331
      // Predicated region
      $region9: #{tpu_custom_call.1} parent=5 // pred_check
        _
      $region10: #{tpu_custom_call.1} parent=5 // pred_check_branch
        %334 = sbr.rel (%p331) target = $region12
      $region11: #{tpu_custom_call.1} parent=5 // pred_region
        %s335 = ssub.s32 %s29, 1
        // Predicated region
        $region13: #{tpu_custom_call.1} parent=11 // pred_check
          %p336 = pneg %p90
        $region14: #{tpu_custom_call.1} parent=11 // pred_check_branch
          %338 = sbr.rel (%p336) target = $region16
        $region15: #{tpu_custom_call.1} parent=11 // pred_region
          %340 = vsyncadd [#allocation6], 0
          %s342 = sshll.u32 %s1, 4
          %s343 = int_to_ptr.hbm [resolvable:$true] %s342
          %s344 = sshll.u32 [#allocation5], 4
          %s345 = int_to_ptr.vmem [resolvable:$true] %s344
          %347 = dma.hbm_to_vmem [thread:$0]  %s343, 16, %s345, [#allocation6]
        $region16: #{tpu_custom_call.1} parent=11 // pred_fallthru
          _
        // Predicated region
        $region17: #{tpu_custom_call.1} parent=11 // pred_check
          %p348 = pneg %p111
        $region18: #{tpu_custom_call.1} parent=11 // pred_check_branch
          %350 = sbr.rel (%p348) target = $region20
        $region19: #{tpu_custom_call.1} parent=11 // pred_region
          _
        $region20: #{tpu_custom_call.1} parent=11 // pred_fallthru
          _
        // Predicated region
        $region21: #{tpu_custom_call.1} parent=11 // pred_check
          %p351 = pneg %p132
        $region22: #{tpu_custom_call.1} parent=11 // pred_check_branch
          %353 = sbr.rel (%p351) target = $region24
        $region23: #{tpu_custom_call.1} parent=11 // pred_region
          %355 = vsyncadd [#allocation6], 0
          %s356 = sshll.u32 %s3, 4
          %s357 = int_to_ptr.hbm [resolvable:$true] %s356
          %s358 = sshll.u32 [#allocation7], 4
          %s359 = int_to_ptr.vmem [resolvable:$true] %s358
          %364 = dma.hbm_to_vmem [thread:$0]  %s357, 256, %s359, [#allocation6], 64, 64, 4
        $region24: #{tpu_custom_call.1} parent=11 // pred_fallthru
          _
        // Predicated region
        $region25: #{tpu_custom_call.1} parent=11 // pred_check
          %p365 = pneg %p153
        $region26: #{tpu_custom_call.1} parent=11 // pred_check_branch
          %367 = sbr.rel (%p365) target = $region28
        $region27: #{tpu_custom_call.1} parent=11 // pred_region
          %369 = vsyncadd [#allocation9], 0
          %s370 = sshll.u32 %s4, 4
          %s371 = int_to_ptr.hbm [resolvable:$true] %s370
          %s372 = sshll.u32 [#allocation8], 4
          %s373 = int_to_ptr.vmem [resolvable:$true] %s372
          %378 = dma.hbm_to_vmem [thread:$0]  %s371, 256, %s373, [#allocation9], 64, 64, 4
        $region28: #{tpu_custom_call.1} parent=11 // pred_fallthru
          _
        // Predicated region
        $region29: #{tpu_custom_call.1} parent=11 // pred_check
          %p379 = pneg %p174
        $region30: #{tpu_custom_call.1} parent=11 // pred_check_branch
          %381 = sbr.rel (%p379) target = $region32
        $region31: #{tpu_custom_call.1} parent=11 // pred_region
          %383 = vsyncadd [#allocation9], 0
          %s384 = sshll.u32 %s5, 4
          %s385 = int_to_ptr.hbm [resolvable:$true] %s384
          %s386 = sshll.u32 [#allocation10], 4
          %s387 = int_to_ptr.vmem [resolvable:$true] %s386
          %392 = dma.hbm_to_vmem [thread:$0]  %s385, 256, %s387, [#allocation9], 64, 64, 4
        $region32: #{tpu_custom_call.1} parent=11 // pred_fallthru
          _
        // Predicated region
        $region33: #{tpu_custom_call.1} parent=11 // pred_check
          %p393 = pneg %p195
        $region34: #{tpu_custom_call.1} parent=11 // pred_check_branch
          %395 = sbr.rel (%p393) target = $region36
        $region35: #{tpu_custom_call.1} parent=11 // pred_region
          _
        $region36: #{tpu_custom_call.1} parent=11 // pred_fallthru
          _
        // Predicated region
        $region37: #{tpu_custom_call.1} parent=11 // pred_check
          %p396 = pneg %p216
        $region38: #{tpu_custom_call.1} parent=11 // pred_check_branch
          %398 = sbr.rel (%p396) target = $region40
        $region39: #{tpu_custom_call.1} parent=11 // pred_region
          _
        $region40: #{tpu_custom_call.1} parent=11 // pred_fallthru
          _
        // Predicated region
        $region41: #{tpu_custom_call.1} parent=11 // pred_check
          %p399 = pneg %p237
        $region42: #{tpu_custom_call.1} parent=11 // pred_check_branch
          %401 = sbr.rel (%p399) target = $region44
        $region43: #{tpu_custom_call.1} parent=11 // pred_region
          _
        $region44: #{tpu_custom_call.1} parent=11 // pred_fallthru
          _
      $region12: #{tpu_custom_call.1} parent=5 // pred_fallthru
        _
      %p402 = scmp.lt.s32.totalorder %s29, 2
      // Predicated region
      $region45: #{tpu_custom_call.1} parent=5 // pred_check
        %p403 = pneg %p402
      $region46: #{tpu_custom_call.1} parent=5 // pred_check_branch
        %405 = sbr.rel (%p403) target = $region48
      $region47: #{tpu_custom_call.1} parent=5 // pred_region
        // Predicated region
        $region49: #{tpu_custom_call.1} parent=47 // pred_check
          %p406 = pneg %p63
        $region50: #{tpu_custom_call.1} parent=47 // pred_check_branch
          %408 = sbr.rel (%p406) target = $region52
        $region51: #{tpu_custom_call.1} parent=47 // pred_region
          %s409 = sand.u32 %s53, 1
          %s410 = scalar_lea.sflag [#allocation3], %s409
          %s411 = sand.u32 %s53, 1
          %s412 = smul.addr %s411, 8
          %s413 = scalar_lea.vmem [#allocation2], %s412
          %415 = vsyncadd %s410, 0
          %s416 = sadd.s32 %s37, %s36
          %s417 = smul.addr %s416, 8
          %s418 = scalar_lea.hbm %s0, %s417
          %s420 = sshll.u32 %s418, 4
          %s421 = int_to_ptr.hbm [resolvable:$true] %s420
          %s422 = sshll.u32 %s413, 4
          %s423 = int_to_ptr.vmem [resolvable:$true] %s422
          %425 = dma.hbm_to_vmem [thread:$0]  %s421, 128, %s423, %s410
        $region52: #{tpu_custom_call.1} parent=47 // pred_fallthru
          _
      $region48: #{tpu_custom_call.1} parent=5 // pred_fallthru
        _
      %p426 = scmp.le.s32.totalorder 1, %s29
      %p427 = scmp.lt.s32.totalorder %s29, 3
      %p428 = pnand %p426, %p427
      %p429 = pneg %p428
      // Predicated region
      $region53: #{tpu_custom_call.1} parent=5 // pred_check
        _
      $region54: #{tpu_custom_call.1} parent=5 // pred_check_branch
        %431 = sbr.rel (%p428) target = $region56
      $region55: #{tpu_custom_call.1} parent=5 // pred_region
        %s432 = ssub.s32 %s29, 1
        %s433 = sand.u32 %s56, 1
        %s434 = scalar_lea.sflag [#allocation3], %s433
        %s435 = sand.u32 %s56, 1
        %s436 = smul.addr %s435, 8
        %s437 = scalar_lea.vmem [#allocation2], %s436
        // Predicated region
        $region57: #{tpu_custom_call.1} parent=55 // pred_check
          %p438 = pneg %p69
        $region58: #{tpu_custom_call.1} parent=55 // pred_check_branch
          %440 = sbr.rel (%p438) target = $region60
        $region59: #{tpu_custom_call.1} parent=55 // pred_region
          %442 = dma.done %s434, 128
        $region60: #{tpu_custom_call.1} parent=55 // pred_fallthru
          _
        // Predicated region
        $region61: #{tpu_custom_call.1} parent=55 // pred_check
          %p443 = pneg %p90
        $region62: #{tpu_custom_call.1} parent=55 // pred_check_branch
          %445 = sbr.rel (%p443) target = $region64
        $region63: #{tpu_custom_call.1} parent=55 // pred_region
          %447 = dma.done [#allocation6], 16
        $region64: #{tpu_custom_call.1} parent=55 // pred_fallthru
          _
        // Predicated region
        $region65: #{tpu_custom_call.1} parent=55 // pred_check
          %p448 = pneg %p132
        $region66: #{tpu_custom_call.1} parent=55 // pred_check_branch
          %450 = sbr.rel (%p448) target = $region68
        $region67: #{tpu_custom_call.1} parent=55 // pred_region
          %452 = dma.done [#allocation6], 256
        $region68: #{tpu_custom_call.1} parent=55 // pred_fallthru
          _
        // Predicated region
        $region69: #{tpu_custom_call.1} parent=55 // pred_check
          %p453 = pneg %p153
        $region70: #{tpu_custom_call.1} parent=55 // pred_check_branch
          %455 = sbr.rel (%p453) target = $region72
        $region71: #{tpu_custom_call.1} parent=55 // pred_region
          %457 = dma.done [#allocation9], 256
        $region72: #{tpu_custom_call.1} parent=55 // pred_fallthru
          _
        // Predicated region
        $region73: #{tpu_custom_call.1} parent=55 // pred_check
          %p458 = pneg %p174
        $region74: #{tpu_custom_call.1} parent=55 // pred_check_branch
          %460 = sbr.rel (%p458) target = $region76
        $region75: #{tpu_custom_call.1} parent=55 // pred_region
          %462 = dma.done [#allocation9], 256
        $region76: #{tpu_custom_call.1} parent=55 // pred_fallthru
          _
        %s463 = sand.u32 %s56, 1
        %s464 = scalar_lea.sflag [#allocation3], %s463
        %s465 = sand.u32 %s56, 1
        %s466 = smul.addr %s465, 8
        %s467 = scalar_lea.vmem [#allocation2], %s466
        %p468 = pneg %p69
        %p469 = pneg %p66
        %p470 = pneg %p90
        %p471 = pneg %p87
        %p472 = pneg %p111
        %p473 = pneg %p108
        %p474 = pneg %p132
        %p475 = pneg %p129
        %p476 = pneg %p153
        %p477 = pneg %p150
        %p478 = pneg %p174
        %p479 = pneg %p171
        %p480 = pneg %p195
        %p481 = pneg %p192
        %p482 = pneg %p216
        %p483 = pneg %p213
        %p484 = pneg %p237
        %p485 = pneg %p234
        %p486 = pneg %p265
        %p487 = pneg %p262
        %s488 = sand.u32 %s252, 1
        %s489 = scalar_lea.sflag [#allocation4], %s488
        %s490 = sand.u32 %s252, 1
        %s491 = smul.addr %s490, 4
        %s492 = scalar_lea.vmem [#allocation11], %s491
        %p493 = pneg %p293
        %p494 = pneg %p290
        %s495 = sand.u32 %s34, 1
        %s496 = scalar_lea.sflag [#allocation13], %s495
        %s497 = sand.u32 %s280, 1
        %s498 = smul.addr %s497, 4
        %s499 = scalar_lea.vmem [#allocation12], %s498
        %p500 = pneg %p321
        %p501 = pneg %p318
        %s502 = sand.u32 %s34, 1
        %s503 = scalar_lea.sflag [#allocation13], %s502
        %s504 = sand.u32 %s308, 1
        %s505 = smul.addr %s504, 4
        %s506 = scalar_lea.vmem [#allocation14], %s505
        %v508 = vld [vmem:[%s437] sm:$0xff]
        %v509 = vld [vmem:[#allocation5] sm:$0x1]
        %v510 = vld [vmem:[%s2] sm:$0x1]
        %vm511 = vcmask 261120
        %v512 = vsel %vm511, %v508, 0.0
        %513 = vadd.xlane.f32.xlu0 %v512
        %v514 = vpop.xlane.xlu0 %513
        %v515 = vrcp.pop 32.0
        %v516 = vmul.f32 32.0, %v515
        %v517 = vsub.f32 1.0, %v516
        %v518 = vmul.f32 %v515, %v517
        %v519 = vadd.f32 %v515, %v518
        %vm520 = vweird.f32 %v515
        %v521 = vsel %vm520, %v515, %v519
        %v522 = vmul.f32 %v514, %v521
        %v523 = vsub.f32 %v508, %v522
        %v524 = vmul.f32 %v523, %v523
        %v525 = vsel %vm511, %v524, 0.0
        %526 = vadd.xlane.f32.xlu0 %v525
        %v527 = vpop.xlane.xlu0 %526
        %v528 = vmul.f32 %v527, %v521
        %v529 = vadd.f32 %v528, 1e-05
        %v530 = vrsqrt.pop %v529
        %v531 = vmul.f32 %v530, %v529
        %v532 = vmul.f32 %v531, %v530
        %v533 = vmul.f32 0.5, %v532
        %v534 = vsub.f32 1.5, %v533
        %v535 = vmul.f32 %v530, %v534
        %vm536 = vweird.f32 %v529
        %vm537 = vweird.f32 %v530
        %vm538 = vmor %vm536, %vm537
        %v539 = vsel %vm538, %v530, %v535
        %v540 = vmul.f32 %v523, %v539
        %v542 = vperm.slane %v509, 0
        %v544 = vmul.f32 %v540, %v542
        %v546 = vperm.slane %v510, 0
        %v548 = vadd.f32 %v544, %v546
        %v549 = vpack.c.bf16 %v548, %v548
        %v550 = vld [vmem:[#allocation7] sm:$0xf]
        %v551 = vld [vmem:[#allocation7 + $0x4] sm:$0xf]
        %v552 = vld [vmem:[#allocation7 + $0x8] sm:$0xf]
        %v553 = vld [vmem:[#allocation7 + $0xc] sm:$0xf]
        %v554 = vld [vmem:[%s6] sm:$0x1]
        %v556 = vperm.slane %v554, 0
        %v562 = vunpack.c.l.b16 %v550
        %v563 = vunpack.c.l.b16 %v551
        %v564 = vunpack.c.l.b16 %v552
        %v565 = vunpack.c.l.b16 %v553
        %v566 = vpack.c.b16 %v563, %v562
        %v567 = vpack.c.b16 %v565, %v564
        %v571 = vsel %vm511, %v549, 0
        %573 = vmatpush.bf16.msra.mxu0 0
        %574 = vmatpush.bf16.msra.mxu0 0
        %575 = vmatpush.bf16.msra.mxu0 0
        %576 = vmatpush.bf16.msra.mxu0 0
        %577 = vmatpush.bf16.msra.mxu0 0
        %578 = vmatpush.bf16.msra.mxu0 0
        %579 = vmatpush.bf16.msra.mxu0 %v567
        %580 = vmatpush.bf16.msra.mxu0 %v566
        %581 = vmatmul.bf16.gmra.mxu0 %v571
        %v582 = vpop.f32.mrf.mxu0
        %v583 = vadd.f32 %v556, %v582
        %v584 = vpop.f32.mrf.mxu0
        %585 = vdwg.mxu0
        %v586 = vpack.c.bf16 %v583, %v583
        %vm587 = vcmask 257024
        %588 = vst.msk [vmem:[%s492] sm:$0xf] %vm587, %v586
        %v589 = vld [vmem:[#allocation8] sm:$0xf]
        %v590 = vld [vmem:[#allocation8 + $0x4] sm:$0xf]
        %v591 = vld [vmem:[#allocation8 + $0x8] sm:$0xf]
        %v592 = vld [vmem:[#allocation8 + $0xc] sm:$0xf]
        %v593 = vld [vmem:[%s7] sm:$0x1]
        %v595 = vperm.slane %v593, 0
        %v601 = vunpack.c.l.b16 %v589
        %v602 = vunpack.c.l.b16 %v590
        %v603 = vunpack.c.l.b16 %v591
        %v604 = vunpack.c.l.b16 %v592
        %v605 = vpack.c.b16 %v602, %v601
        %v606 = vpack.c.b16 %v604, %v603
        %609 = vmatpush.bf16.msra.mxu0 0
        %610 = vmatpush.bf16.msra.mxu0 0
        %611 = vmatpush.bf16.msra.mxu0 0
        %612 = vmatpush.bf16.msra.mxu0 0
        %613 = vmatpush.bf16.msra.mxu0 0
        %614 = vmatpush.bf16.msra.mxu0 0
        %615 = vmatpush.bf16.msra.mxu0 %v606
        %616 = vmatpush.bf16.msra.mxu0 %v605
        %617 = vmatmul.bf16.gmra.mxu0 %v571
        %v618 = vpop.f32.mrf.mxu0
        %v619 = vadd.f32 %v595, %v618
        %v620 = vpop.f32.mrf.mxu0
        %621 = vdwg.mxu0
        %v622 = vpack.c.bf16 %v619, %v619
        %623 = vst.msk [vmem:[%s499] sm:$0xf] %vm587, %v622
        %v624 = vld [vmem:[#allocation10] sm:$0xf]
        %v625 = vld [vmem:[#allocation10 + $0x4] sm:$0xf]
        %v626 = vld [vmem:[#allocation10 + $0x8] sm:$0xf]
        %v627 = vld [vmem:[#allocation10 + $0xc] sm:$0xf]
        %v628 = vld [vmem:[%s8] sm:$0x1]
        %v630 = vperm.slane %v628, 0
        %v636 = vunpack.c.l.b16 %v624
        %v637 = vunpack.c.l.b16 %v625
        %v638 = vunpack.c.l.b16 %v626
        %v639 = vunpack.c.l.b16 %v627
        %v640 = vpack.c.b16 %v637, %v636
        %v641 = vpack.c.b16 %v639, %v638
        %644 = vmatpush.bf16.msra.mxu0 0
        %645 = vmatpush.bf16.msra.mxu0 0
        %646 = vmatpush.bf16.msra.mxu0 0
        %647 = vmatpush.bf16.msra.mxu0 0
        %648 = vmatpush.bf16.msra.mxu0 0
        %649 = vmatpush.bf16.msra.mxu0 0
        %650 = vmatpush.bf16.msra.mxu0 %v641
        %651 = vmatpush.bf16.msra.mxu0 %v640
        %652 = vmatmul.bf16.gmra.mxu0 %v571
        %v653 = vpop.f32.mrf.mxu0
        %v654 = vadd.f32 %v630, %v653
        %v655 = vpop.f32.mrf.mxu0
        %656 = vdwg.mxu0
        %v657 = vpack.c.bf16 %v654, %v654
        %658 = vst.msk [vmem:[%s506] sm:$0xf] %vm587, %v657
        %s659 = sand.u32 %s252, 1
        %s660 = scalar_lea.sflag [#allocation4], %s659
        %s661 = sand.u32 %s252, 1
        %s662 = smul.addr %s661, 4
        %s663 = scalar_lea.vmem [#allocation11], %s662
        %s664 = sand.u32 %s34, 1
        %s665 = scalar_lea.sflag [#allocation13], %s664
        %s666 = sand.u32 %s280, 1
        %s667 = smul.addr %s666, 4
        %s668 = scalar_lea.vmem [#allocation12], %s667
        %s669 = sand.u32 %s34, 1
        %s670 = scalar_lea.sflag [#allocation13], %s669
        %s671 = sand.u32 %s308, 1
        %s672 = smul.addr %s671, 4
        %s673 = scalar_lea.vmem [#allocation14], %s672
        // Predicated region
        $region77: #{tpu_custom_call.1} parent=55 // pred_check
          %p674 = pneg %p262
        $region78: #{tpu_custom_call.1} parent=55 // pred_check_branch
          %676 = sbr.rel (%p674) target = $region80
        $region79: #{tpu_custom_call.1} parent=55 // pred_region
          %678 = vsyncadd %s660, 0
          %s679 = sadd.s32 %s39, %s38
          %s680 = smul.addr %s679, 4
          %s681 = scalar_lea.hbm %s9, %s680
          %s683 = sshll.u32 %s663, 4
          %s684 = int_to_ptr.vmem [resolvable:$true] %s683
          %s685 = sshll.u32 %s681, 4
          %s686 = int_to_ptr.hbm [resolvable:$true] %s685
          %688 = dma.vmem_to_hbm [thread:$0]  %s684, 64, %s686, %s660
        $region80: #{tpu_custom_call.1} parent=55 // pred_fallthru
          _
        // Predicated region
        $region81: #{tpu_custom_call.1} parent=55 // pred_check
          %p689 = pneg %p290
        $region82: #{tpu_custom_call.1} parent=55 // pred_check_branch
          %691 = sbr.rel (%p689) target = $region84
        $region83: #{tpu_custom_call.1} parent=55 // pred_region
          %693 = vsyncadd %s665, 0
          %s694 = sadd.s32 %s39, %s38
          %s695 = smul.addr %s694, 4
          %s696 = scalar_lea.hbm %s10, %s695
          %s698 = sshll.u32 %s668, 4
          %s699 = int_to_ptr.vmem [resolvable:$true] %s698
          %s700 = sshll.u32 %s696, 4
          %s701 = int_to_ptr.hbm [resolvable:$true] %s700
          %703 = dma.vmem_to_hbm [thread:$0]  %s699, 64, %s701, %s665
        $region84: #{tpu_custom_call.1} parent=55 // pred_fallthru
          _
        // Predicated region
        $region85: #{tpu_custom_call.1} parent=55 // pred_check
          %p704 = pneg %p318
        $region86: #{tpu_custom_call.1} parent=55 // pred_check_branch
          %706 = sbr.rel (%p704) target = $region88
        $region87: #{tpu_custom_call.1} parent=55 // pred_region
          %708 = vsyncadd %s670, 0
          %s709 = sadd.s32 %s39, %s38
          %s710 = smul.addr %s709, 4
          %s711 = scalar_lea.hbm %s11, %s710
          %s713 = sshll.u32 %s673, 4
          %s714 = int_to_ptr.vmem [resolvable:$true] %s713
          %s715 = sshll.u32 %s711, 4
          %s716 = int_to_ptr.hbm [resolvable:$true] %s715
          %718 = dma.vmem_to_hbm [thread:$0]  %s714, 64, %s716, %s670
        $region88: #{tpu_custom_call.1} parent=55 // pred_fallthru
          _
      $region56: #{tpu_custom_call.1} parent=5 // pred_fallthru
        _
      %p719 = scmp.le.s32.totalorder 2, %s29
      // Predicated region
      $region89: #{tpu_custom_call.1} parent=5 // pred_check
        %p720 = pneg %p719
      $region90: #{tpu_custom_call.1} parent=5 // pred_check_branch
        %722 = sbr.rel (%p720) target = $region92
      $region91: #{tpu_custom_call.1} parent=5 // pred_region
        %s723 = ssub.s32 %s29, 2
        // Predicated region
        $region93: #{tpu_custom_call.1} parent=91 // pred_check
          %p724 = pneg %p268
        $region94: #{tpu_custom_call.1} parent=91 // pred_check_branch
          %726 = sbr.rel (%p724) target = $region96
        $region95: #{tpu_custom_call.1} parent=91 // pred_region
          %s727 = sand.u32 %s253, 1
          %s728 = scalar_lea.sflag [#allocation4], %s727
          %s729 = sand.u32 %s253, 1
          %s730 = smul.addr %s729, 4
          %s731 = scalar_lea.vmem [#allocation11], %s730
          %733 = dma.done %s728, 64
        $region96: #{tpu_custom_call.1} parent=91 // pred_fallthru
          _
        // Predicated region
        $region97: #{tpu_custom_call.1} parent=91 // pred_check
          %p734 = pneg %p296
        $region98: #{tpu_custom_call.1} parent=91 // pred_check_branch
          %736 = sbr.rel (%p734) target = $region100
        $region99: #{tpu_custom_call.1} parent=91 // pred_region
          %s737 = sand.u32 %s35, 1
          %s738 = scalar_lea.sflag [#allocation13], %s737
          %s739 = sand.u32 %s281, 1
          %s740 = smul.addr %s739, 4
          %s741 = scalar_lea.vmem [#allocation12], %s740
          %743 = dma.done %s738, 64
        $region100: #{tpu_custom_call.1} parent=91 // pred_fallthru
          _
        // Predicated region
        $region101: #{tpu_custom_call.1} parent=91 // pred_check
          %p744 = pneg %p324
        $region102: #{tpu_custom_call.1} parent=91 // pred_check_branch
          %746 = sbr.rel (%p744) target = $region104
        $region103: #{tpu_custom_call.1} parent=91 // pred_region
          %s747 = sand.u32 %s35, 1
          %s748 = scalar_lea.sflag [#allocation13], %s747
          %s749 = sand.u32 %s309, 1
          %s750 = smul.addr %s749, 4
          %s751 = scalar_lea.vmem [#allocation14], %s750
          %753 = dma.done %s748, 64
        $region104: #{tpu_custom_call.1} parent=91 // pred_fallthru
          _
      $region92: #{tpu_custom_call.1} parent=5 // pred_fallthru
        _
    $region6: #{tpu_custom_call.1} parent=1 // loop_footer
      %s33 = sadd.s32 1, %s29
    $region7: #{tpu_custom_call.1} parent=1 // loop_footer_branch
      %28 = sbr.rel target = $region3
    $region8: #{tpu_custom_call.1} parent=1 // loop_exit
      _
    %754 = vsyncpa [#allocation3], 1
    %s755 = scalar_lea.sflag [#allocation3], 1
    %756 = vsyncpa %s755, 1
    %757 = vsyncpa [#allocation6], 1
    %758 = vsyncpa [#allocation9], 1
    %759 = vsyncpa [#allocation4], 1
    %s760 = scalar_lea.sflag [#allocation4], 1
    %761 = vsyncpa %s760, 1
    %762 = vsyncpa [#allocation13], 1
    %s763 = scalar_lea.sflag [#allocation13], 1
    %764 = vsyncpa %s763, 1

</llo_original>
